<compile_context>
chip_gen: v6e
topology: v6e:2x2x1
jax: 0.10.0
libtpu: 0.0.40
codegen_flags: <defaults>
</compile_context>

<pallas_src>
import functools

import jax
import jax.numpy as jnp
from jax.experimental import pallas as pl
from jax.experimental.pallas import tpu as pltpu


def _sev_bce_tile_kernel(
    wa_ref,        # (M+1, D) f32  rows 0..M-1: mask0*w ; row M: w   (resident)
    const_ref,     # (M+1, 1) f32  per-row constant, bias folded in  (resident)
    x_ref,         # (TB, D)  f32  batch tile of features
    prob_ref,      # (1, TB)  f32  model probabilities (lane-dense)
    tgt_ref,       # (1, TB)  f32  targets (lane-dense)
    partials_ref,  # (1, 1, 128) f32 out: [bce_sum, sev_num, pos_count, 0...]
    *,
    batch: int,
    block_b: int,
    num_maps: int,
):
    i = pl.program_id(0)
    tb = block_b

    # Valid-row mask for the (possibly padded) last tile; batch is on the lane axis.
    lane = jax.lax.broadcasted_iota(jnp.int32, (1, tb), 1)
    valid = (i * tb + lane) < batch                                   # (1, TB) bool

    # ---------------- BCE partial sum (lane-dense) ----------------
    o = jnp.where(valid, prob_ref[...], 0.5)                          # sanitise pads
    t = jnp.where(valid, tgt_ref[...], 0.0)
    log_o = jnp.maximum(jnp.log(o), -100.0)                           # torch log clamp
    log_1mo = jnp.maximum(jnp.log(1.0 - o), -100.0)
    bce_terms = -(t * log_o + (1.0 - t) * log_1mo)
    bce_sum = jnp.sum(jnp.where(valid, bce_terms, 0.0))

    # ---------------- SEV partial sums: single fused MXU pass ----------------
    # logits[m, b] = sum_d wa_aug[m, d] * x[b, d] + const[m]   (bias already in const)
    logits = jax.lax.dot_general(
        wa_ref[...], x_ref[...],
        dimension_numbers=(((1,), (1,)), ((), ())),
        preferred_element_type=jnp.float32)                           # (M+1, TB)
    logits = logits + const_ref[...]                                  # broadcast over lanes

    # min over maps BEFORE the sigmoid (monotone), only the last row is y_logit.
    min_logit = jnp.min(logits[:num_maps, :], axis=0, keepdims=True)  # (1, TB)
    y_logit = logits[num_maps:num_maps + 1, :]                        # (1, TB)

    pos = (y_logit > 0.0) & valid                                     # == (y_pred > 0.5)
    min_p = jax.nn.sigmoid(min_logit)                                 # B sigmoids total
    sev_terms = jnp.where(pos, jnp.maximum(min_p - 0.5, -0.05), 0.0)
    sev_sum = jnp.sum(sev_terms)
    pos_cnt = jnp.sum(jnp.where(pos, 1.0, 0.0))

    # ---------------- lane-dense partial-sum block ----------------
    lane128 = jax.lax.broadcasted_iota(jnp.int32, (1, 1, 128), 2)
    partials_ref[...] = (jnp.where(lane128 == 0, bce_sum, 0.0)
                         + jnp.where(lane128 == 1, sev_sum, 0.0)
                         + jnp.where(lane128 == 2, pos_cnt, 0.0))


def optimized_sev_forward(probs, target, x, data_map, data_mean_map, data_mean,
                          w, b, sev_penalty, positive_penalty, *, block_b=512):
    """Returns (bce, bce + sev + positive, sev).

    `bce` is exactly OriginalLoss.forward(output, target) = nn.BCELoss()(output, target).
    """
    f32 = jnp.float32
    B, D = x.shape
    M = data_map.shape[0]

    # ---- map-only precompute (O(M*D), done once, per review) ----
    w_row = w.reshape(1, D).astype(f32)                               # (1, D)
    mask0 = (data_map.astype(f32) == 0.0).astype(f32)                 # (M, D)
    wa_aug = jnp.concatenate([mask0 * w_row, w_row], axis=0)          # (M+1, D)
    const = jnp.sum((1.0 - mask0) * data_mean_map.astype(f32) * w_row,
                    axis=1, keepdims=True)                            # (M, 1)
    const_aug = (jnp.concatenate([const, jnp.zeros((1, 1), f32)], axis=0)
                 + jnp.asarray(b, f32))                               # (M+1, 1) bias folded in

    # lane-dense (1, B) views of the per-row scalars
    probs_row = probs.reshape(1, B).astype(f32)
    target_row = target.reshape(1, B).astype(f32)
    x_f32 = x.astype(f32)

    tb = block_b if B > block_b else B                                # full-B block if small
    grid_b = pl.cdiv(B, tb)

    kernel = functools.partial(_sev_bce_tile_kernel,
                               batch=B, block_b=tb, num_maps=M)

    cost = pl.CostEstimate(
        flops=int(2 * B * D * (M + 1)),
        transcendentals=int(3 * B),
        bytes_accessed=int(4 * (B * D + 2 * B + (M + 1) * (D + 1) + grid_b * 128)),
    )

    partials = pl.pallas_call(
        kernel,
        grid=(grid_b,),
        in_specs=[
            pl.BlockSpec((M + 1, D), lambda i: (0, 0)),   # wa_aug, resident
            pl.BlockSpec((M + 1, 1), lambda i: (0, 0)),   # const_aug, resident
            pl.BlockSpec((tb, D), lambda i: (i, 0)),      # x tile
            pl.BlockSpec((1, tb), lambda i: (0, i)),      # probs (lane-dense)
            pl.BlockSpec((1, tb), lambda i: (0, i)),      # target (lane-dense)
        ],
        out_specs=pl.BlockSpec((1, 1, 128), lambda i: (i, 0, 0)),
        out_shape=jax.ShapeDtypeStruct((grid_b, 1, 128), f32),
        compiler_params=pltpu.CompilerParams(
            dimension_semantics=("parallel",),            # megacore-splittable on v7x
            vmem_limit_bytes=32 * 1024 * 1024),           # safe on v7x's 64 MiB VMEM
        cost_estimate=cost,
    )(wa_aug, const_aug, x_f32, probs_row, target_row)

    # ---- trivial O(grid) finalize in plain JAX (per-tile partials -> scalars) ----
    sums = jnp.sum(partials, axis=(0, 1))                             # (128,)
    bce = sums[0] / B
    sev = sev_penalty * sums[1] / (sums[2] + 1e-10)

    # baseline positive loss: O(D) work, precomputed outside the grid
    pm = jax.nn.sigmoid(data_mean.reshape(1, D).astype(f32) @ w.astype(f32)
                        + jnp.asarray(b, f32))                        # (1, 1)
    pos_loss = positive_penalty * jnp.maximum(pm - 0.5, -0.05)        # (1, 1)

    total = bce + sev + pos_loss                                      # (1, 1) via broadcast
    return bce, total, sev


def _reference_forward(probs, target, x, data_map, data_mean_map, data_mean,
                       w, b, sev_penalty, positive_penalty):
    """Direct jnp translation of the PyTorch module (materialises (M, B, D))."""
    def model(z):
        return jax.nn.sigmoid(z @ w + b)

    dataset = jnp.where(data_map[:, None, :] == 0,
                        x[None, :, :], data_mean_map[:, None, :])     # (M, B, D)
    out = model(dataset)                                              # (M, B, 1)
    y_pred = model(x)                                                 # (B, 1)
    gt = (y_pred > 0.5).astype(jnp.float32)
    sev = sev_penalty * jnp.sum(
        jnp.maximum(jnp.min(out, axis=0) - 0.5, -0.05) * gt) / (jnp.sum(gt) + 1e-10)
    pos = positive_penalty * jnp.maximum(model(data_mean[None, :]) - 0.5, -0.05)
    bce = -jnp.mean(target * jnp.maximum(jnp.log(probs), -100.0)
                    + (1.0 - target) * jnp.maximum(jnp.log(1.0 - probs), -100.0))
    return bce, bce + sev + pos, sev


if __name__ == "__main__":
    # Small but non-trivial shapes: B not divisible by the tile so the masked
    # last tile and the multi-tile "parallel" partial-sum path are exercised.
    B, D, M = 200, 64, 5
    TB = 128

    key = jax.random.PRNGKey(0)
    kx, kw, kb, km, kmean, ko, kt = jax.random.split(key, 7)

    x = jax.random.normal(kx, (B, D), jnp.float32)
    w = jax.random.normal(kw, (D, 1), jnp.float32) * 0.3
    b = jax.random.normal(kb, (1,), jnp.float32)[0]
    data_map = (jax.random.uniform(km, (M, D)) > 0.5).astype(jnp.float32)
    data_mean = jax.random.normal(kmean, (D,), jnp.float32) * 0.1
    data_mean_map = jnp.broadcast_to(data_mean, (M, D)).astype(jnp.float32)
    output = jax.nn.sigmoid(jax.random.normal(ko, (B, 1), jnp.float32))
    target = (jax.random.uniform(kt, (B, 1)) > 0.5).astype(jnp.float32)

    sev_penalty = 0.1
    positive_penalty = 0.2

    bce, total, sev = optimized_sev_forward(
        output, target, x, data_map, data_mean_map, data_mean,
        w, b, sev_penalty, positive_penalty, block_b=TB)
    jax.block_until_ready((bce, total, sev))

    rbce, rtotal, rsev = _reference_forward(
        output, target, x, data_map, data_mean_map, data_mean,
        w, b, sev_penalty, positive_penalty)

    # OriginalLoss (the spec) == plain BCELoss: the first output must match it.
    assert jnp.allclose(bce, rbce, atol=1e-5), (bce, rbce)
    assert jnp.allclose(total, rtotal, atol=1e-5), (total, rtotal)
    assert jnp.allclose(sev, rsev, atol=1e-5), (sev, rsev)
    assert bce.shape == () and total.shape == (1, 1) and sev.shape == ()

    print("KERNEL_OK")
</pallas_src>

<mosaic_0001>
module attributes {stable_mosaic.version = 11 : i64} {
  func.func @_sev_bce_tile_kernel(%arg0: i32, %arg1: memref<6x64xf32, #tpu.memory_space<vmem>>, %arg2: memref<6x1xf32, #tpu.memory_space<vmem>>, %arg3: memref<128x64xf32, #tpu.memory_space<vmem>>, %arg4: memref<1x128xf32, #tpu.memory_space<vmem>>, %arg5: memref<1x128xf32, #tpu.memory_space<vmem>>, %arg6: memref<1x1x128xf32, #tpu.memory_space<vmem>>) attributes {dimension_semantics = [#tpu.dimension_semantics<parallel>], iteration_bounds = array<i64: 2>, scalar_prefetch = 0 : i64, scratch_operands = 0 : i64, tpu.core_type = #tpu.core_type<tc>, window_params = [{pipeline_mode = #tpu.pipeline_mode<synchronous>, transform_indices = @transform_0, window_bounds = array<i64: 6, 64>}, {pipeline_mode = #tpu.pipeline_mode<synchronous>, transform_indices = @transform_1, window_bounds = array<i64: 6, 1>}, {transform_indices = @transform_2, window_bounds = array<i64: 128, 64>}, {transform_indices = @transform_3, window_bounds = array<i64: 1, 128>}, {transform_indices = @transform_4, window_bounds = array<i64: 1, 128>}, {transform_indices = @transform_5, window_bounds = array<i64: 1, 1, 128>}]} {
    %0 = tpu.iota {dimensions = array<i32: 1>} : vector<1x128xi32>
    %c128_i32 = arith.constant 128 : i32
    %1 = arith.muli %arg0, %c128_i32 : i32
    %2 = vector.broadcast %1 : i32 to vector<1x128xi32>
    %3 = arith.addi %2, %0 : vector<1x128xi32>
    %c200_i32 = arith.constant 200 : i32
    %4 = vector.broadcast %c200_i32 : i32 to vector<1x128xi32>
    %5 = arith.cmpi slt, %3, %4 : vector<1x128xi32>
    %c0 = arith.constant 0 : index
    %c0_0 = arith.constant 0 : index
    %6 = vector.load %arg4[%c0, %c0_0] : memref<1x128xf32, #tpu.memory_space<vmem>>, vector<1x128xf32>
    %cst = arith.constant 5.000000e-01 : f32
    %7 = vector.broadcast %cst : f32 to vector<1x128xf32>
    %8 = arith.select %5, %6, %7 : vector<1x128xi1>, vector<1x128xf32>
    %c0_1 = arith.constant 0 : index
    %c0_2 = arith.constant 0 : index
    %9 = vector.load %arg5[%c0_1, %c0_2] : memref<1x128xf32, #tpu.memory_space<vmem>>, vector<1x128xf32>
    %cst_3 = arith.constant 0.000000e+00 : f32
    %10 = vector.broadcast %cst_3 : f32 to vector<1x128xf32>
    %11 = arith.select %5, %9, %10 : vector<1x128xi1>, vector<1x128xf32>
    %12 = math.log %8 : vector<1x128xf32>
    %cst_4 = arith.constant -1.000000e+02 : f32
    %13 = vector.broadcast %cst_4 : f32 to vector<1x128xf32>
    %14 = arith.maximumf %12, %13 : vector<1x128xf32>
    %cst_5 = arith.constant 1.000000e+00 : f32
    %15 = vector.broadcast %cst_5 : f32 to vector<1x128xf32>
    %16 = arith.subf %15, %8 : vector<1x128xf32>
    %17 = math.log %16 : vector<1x128xf32>
    %cst_6 = arith.constant -1.000000e+02 : f32
    %18 = vector.broadcast %cst_6 : f32 to vector<1x128xf32>
    %19 = arith.maximumf %17, %18 : vector<1x128xf32>
    %20 = arith.mulf %11, %14 : vector<1x128xf32>
    %cst_7 = arith.constant 1.000000e+00 : f32
    %21 = vector.broadcast %cst_7 : f32 to vector<1x128xf32>
    %22 = arith.subf %21, %11 : vector<1x128xf32>
    %23 = arith.mulf %22, %19 : vector<1x128xf32>
    %24 = arith.addf %20, %23 : vector<1x128xf32>
    %cst_8 = arith.constant 0.000000e+00 : f32
    %25 = vector.broadcast %cst_8 : f32 to vector<1x128xf32>
    %26 = arith.subf %25, %24 : vector<1x128xf32>
    %cst_9 = arith.constant 0.000000e+00 : f32
    %27 = vector.broadcast %cst_9 : f32 to vector<1x128xf32>
    %28 = arith.select %5, %26, %27 : vector<1x128xi1>, vector<1x128xf32>
    %29 = vector.shape_cast %28 : vector<1x128xf32> to vector<1x1x128xf32>
    %cst_10 = arith.constant dense<0.000000e+00> : vector<1xf32>
    %30 = vector.multi_reduction <add>, %29, %cst_10 [1, 2] : vector<1x1x128xf32> to vector<1xf32>
    %31 = vector.shape_cast %30 : vector<1xf32> to vector<1x1x1xf32>
    %32 = vector.extract %31[0, 0, 0] : f32 from vector<1x1x1xf32>
    %c0_11 = arith.constant 0 : index
    %c0_12 = arith.constant 0 : index
    %33 = vector.load %arg1[%c0_11, %c0_12] : memref<6x64xf32, #tpu.memory_space<vmem>>, vector<6x64xf32>
    %c0_13 = arith.constant 0 : index
    %c0_14 = arith.constant 0 : index
    %34 = vector.load %arg3[%c0_13, %c0_14] : memref<128x64xf32, #tpu.memory_space<vmem>>, vector<128x64xf32>
    %cst_15 = arith.constant dense<0.000000e+00> : vector<6x128xf32>
    %35 = tpu.matmul %33, %34, %cst_15 {dimension_numbers = #tpu.dot_dimension_numbers<[1], [1], [0], [0], [0, 0, 1, 0], [], []>} : vector<6x64xf32>, vector<128x64xf32>, vector<6x128xf32> -> vector<6x128xf32>
    %c0_16 = arith.constant 0 : index
    %c0_17 = arith.constant 0 : index
    %36 = vector.load %arg2[%c0_16, %c0_17] : memref<6x1xf32, #tpu.memory_space<vmem>>, vector<6x1xf32>
    %37 = vector.broadcast %36 : vector<6x1xf32> to vector<6x128xf32>
    %38 = arith.addf %35, %37 : vector<6x128xf32>
    %39 = vector.extract_strided_slice %38 {offsets = [0, 0], sizes = [5, 128], strides = [1, 1]} : vector<6x128xf32> to vector<5x128xf32>
    %cst_18 = arith.constant dense<0x7F800000> : vector<128xf32>
    %40 = vector.multi_reduction <minimumf>, %39, %cst_18 [0] : vector<5x128xf32> to vector<128xf32>
    %41 = vector.shape_cast %40 : vector<128xf32> to vector<1x128xf32>
    %42 = vector.extract_strided_slice %38 {offsets = [5, 0], sizes = [1, 128], strides = [1, 1]} : vector<6x128xf32> to vector<1x128xf32>
    %cst_19 = arith.constant 0.000000e+00 : f32
    %43 = vector.broadcast %cst_19 : f32 to vector<1x128xf32>
    %44 = arith.cmpf ogt, %42, %43 : vector<1x128xf32>
    %45 = arith.andi %44, %5 : vector<1x128xi1>
    %46 = arith.negf %41 : vector<1x128xf32>
    %47 = math.exp %46 : vector<1x128xf32>
    %cst_20 = arith.constant 1.000000e+00 : f32
    %48 = vector.broadcast %cst_20 : f32 to vector<1x128xf32>
    %49 = arith.addf %48, %47 : vector<1x128xf32>
    %50 = arith.divf %48, %49 : vector<1x128xf32>
    %cst_21 = arith.constant 5.000000e-01 : f32
    %51 = vector.broadcast %cst_21 : f32 to vector<1x128xf32>
    %52 = arith.subf %50, %51 : vector<1x128xf32>
    %cst_22 = arith.constant -5.000000e-02 : f32
    %53 = vector.broadcast %cst_22 : f32 to vector<1x128xf32>
    %54 = arith.maximumf %52, %53 : vector<1x128xf32>
    %cst_23 = arith.constant 0.000000e+00 : f32
    %55 = vector.broadcast %cst_23 : f32 to vector<1x128xf32>
    %56 = arith.select %45, %54, %55 : vector<1x128xi1>, vector<1x128xf32>
    %57 = vector.shape_cast %56 : vector<1x128xf32> to vector<1x1x128xf32>
    %cst_24 = arith.constant dense<0.000000e+00> : vector<1xf32>
    %58 = vector.multi_reduction <add>, %57, %cst_24 [1, 2] : vector<1x1x128xf32> to vector<1xf32>
    %59 = vector.shape_cast %58 : vector<1xf32> to vector<1x1x1xf32>
    %60 = vector.extract %59[0, 0, 0] : f32 from vector<1x1x1xf32>
    %cst_25 = arith.constant 1.000000e+00 : f32
    %cst_26 = arith.constant 0.000000e+00 : f32
    %61 = vector.broadcast %cst_25 : f32 to vector<1x128xf32>
    %62 = vector.broadcast %cst_26 : f32 to vector<1x128xf32>
    %63 = arith.select %45, %61, %62 : vector<1x128xi1>, vector<1x128xf32>
    %64 = vector.shape_cast %63 : vector<1x128xf32> to vector<1x1x128xf32>
    %cst_27 = arith.constant dense<0.000000e+00> : vector<1xf32>
    %65 = vector.multi_reduction <add>, %64, %cst_27 [1, 2] : vector<1x1x128xf32> to vector<1xf32>
    %66 = vector.shape_cast %65 : vector<1xf32> to vector<1x1x1xf32>
    %67 = vector.extract %66[0, 0, 0] : f32 from vector<1x1x1xf32>
    %68 = tpu.iota {dimensions = array<i32: 2>} : vector<1x1x128xi32>
    %c0_i32 = arith.constant 0 : i32
    %69 = vector.broadcast %c0_i32 : i32 to vector<1x1x128xi32>
    %70 = arith.cmpi eq, %68, %69 : vector<1x1x128xi32>
    %cst_28 = arith.constant 0.000000e+00 : f32
    %71 = vector.broadcast %32 : f32 to vector<1x1x128xf32>
    %72 = vector.broadcast %cst_28 : f32 to vector<1x1x128xf32>
    %73 = arith.select %70, %71, %72 : vector<1x1x128xi1>, vector<1x1x128xf32>
    %c1_i32 = arith.constant 1 : i32
    %74 = vector.broadcast %c1_i32 : i32 to vector<1x1x128xi32>
    %75 = arith.cmpi eq, %68, %74 : vector<1x1x128xi32>
    %cst_29 = arith.constant 0.000000e+00 : f32
    %76 = vector.broadcast %60 : f32 to vector<1x1x128xf32>
    %77 = vector.broadcast %cst_29 : f32 to vector<1x1x128xf32>
    %78 = arith.select %75, %76, %77 : vector<1x1x128xi1>, vector<1x1x128xf32>
    %79 = arith.addf %73, %78 : vector<1x1x128xf32>
    %c2_i32 = arith.constant 2 : i32
    %80 = vector.broadcast %c2_i32 : i32 to vector<1x1x128xi32>
    %81 = arith.cmpi eq, %68, %80 : vector<1x1x128xi32>
    %cst_30 = arith.constant 0.000000e+00 : f32
    %82 = vector.broadcast %67 : f32 to vector<1x1x128xf32>
    %83 = vector.broadcast %cst_30 : f32 to vector<1x1x128xf32>
    %84 = arith.select %81, %82, %83 : vector<1x1x128xi1>, vector<1x1x128xf32>
    %85 = arith.addf %79, %84 : vector<1x1x128xf32>
    %c0_31 = arith.constant 0 : index
    %c0_32 = arith.constant 0 : index
    %c0_33 = arith.constant 0 : index
    %86 = vector.load %arg6[%c0_31, %c0_32, %c0_33] : memref<1x1x128xf32, #tpu.memory_space<vmem>>, vector<1x1x128xf32>
    tpu.vector_store %arg6[%c0_31, %c0_32, %c0_33], %85 {strides = array<i32>} : memref<1x1x128xf32, #tpu.memory_space<vmem>>, vector<1x1x128xf32>,
    return
  }
  func.func @transform_0(%arg0: i32) -> (i32, i32) {
    %c0_i32 = arith.constant 0 : i32
    %c0_i32_0 = arith.constant 0 : i32
    %c0_i32_1 = arith.constant 0 : i32
    return %c0_i32, %c0_i32_0 : i32, i32
  }
  func.func @transform_1(%arg0: i32) -> (i32, i32) {
    %c0_i32 = arith.constant 0 : i32
    %c0_i32_0 = arith.constant 0 : i32
    %c0_i32_1 = arith.constant 0 : i32
    return %c0_i32, %c0_i32_0 : i32, i32
  }
  func.func @transform_2(%arg0: i32) -> (i32, i32) {
    %c0_i32 = arith.constant 0 : i32
    %c0_i32_0 = arith.constant 0 : i32
    return %arg0, %c0_i32 : i32, i32
  }
  func.func @transform_3(%arg0: i32) -> (i32, i32) {
    %c0_i32 = arith.constant 0 : i32
    %c0_i32_0 = arith.constant 0 : i32
    return %c0_i32, %arg0 : i32, i32
  }
  func.func @transform_4(%arg0: i32) -> (i32, i32) {
    %c0_i32 = arith.constant 0 : i32
    %c0_i32_0 = arith.constant 0 : i32
    return %c0_i32, %arg0 : i32, i32
  }
  func.func @transform_5(%arg0: i32) -> (i32, i32, i32) {
    %c0_i32 = arith.constant 0 : i32
    %c0_i32_0 = arith.constant 0 : i32
    %c0_i32_1 = arith.constant 0 : i32
    return %arg0, %c0_i32, %c0_i32_0 : i32, i32, i32
  }
}

</mosaic_0001>

<llo_original>
// kernel: tpu_custom_call.1
$region0: #{tpu_custom_call.1}
  #allocation0 [shape = 'u32[]', space=smem, size = 0x4, offset = 0x4, fixed_abs, tag = 'smem constant byte address 0x4 - core index']
  #allocation1 [shape = 'u32[144,128]{1,0:T(1,128)}', space=vmem, size = 0x12000, scoped, tag = 'internal scratch']
  %s0 = inlined_call_operand.vmem [shape: f32[6,64], index: 0, kind: input, shape index: {}]
  %s1 = inlined_call_operand.vmem [shape: f32[6,1], index: 1, kind: input, shape index: {}]
  %s2 = inlined_call_operand.vmem [shape: f32[200,64], index: 2, kind: input, shape index: {}]
  %s3 = inlined_call_operand.vmem [shape: f32[1,200], index: 3, kind: input, shape index: {}]
  %s4 = inlined_call_operand.vmem [shape: f32[1,200], index: 4, kind: input, shape index: {}]
  %s5 = inlined_call_operand.hbm [shape: f32[2,1,128], index: 5, kind: output, shape index: {}]
  %s6 = sld [smem:[#allocation0]]
  $region53: #{tpu_custom_call.1} parent=0
    _
  %s8 = ssub.s32 1, %s6
  %s9 = scalar_select 0, %s8, %s6
  $region1: #{tpu_custom_call.1} parent=0
    #allocation2 [shape = 'u8[1024]{0}', space=vmem, size = 0x400, scoped, tag = 'output window, operand 0']
    #allocation3 [shape = 's32[2]{0}', space=sflag, size = 0x8, scoped, tag = 'scoped memory for tpu_custom_call.1']
    %10 = vsyncpa [#allocation3], 0
    %s11 = scalar_lea.sflag [#allocation3], 1
    %12 = vsyncpa %s11, 0
    loop: start=0, step=1, limit=4
    $region2: #{tpu_custom_call.1} parent=1 // loop_pre_header
      _
    $region3: #{tpu_custom_call.1} parent=1 // loop_header
      %s14 = sphi 0, %s18
      %p15 = scmp.ge.s32.totalorder %s14, 4
      %s22 = sphi 0, %s22
      %s24 = sphi 0, %s22
      %s25 = sphi 0, %s24
      %s39 = sphi 0, %s25
      %s43 = sphi 0, %s43
      %s45 = sphi 0, %s43
      %s46 = sphi 0, %s45
      %s60 = sphi 0, %s46
      %s66 = sphi 0, %s68
      %s69 = sphi 0, %s66
      %s70 = sphi 0, %s69
      %s86 = sphi 0, %s70
      %s92 = sphi 0, %s94
      %s95 = sphi 0, %s92
      %s96 = sphi 0, %s95
      %s112 = sphi 0, %s96
      %s118 = sphi 0, %s120
      %s121 = sphi 0, %s118
      %s122 = sphi 0, %s121
      %s138 = sphi 0, %s122
      %s144 = sphi 0, %s146
      %s147 = sphi 0, %s144
      %s148 = sphi 0, %s147
      %s164 = sphi 0, %s148
    $region4: #{tpu_custom_call.1} parent=1 // loop_header_branch
      %17 = sbr.rel (%p15) target = $region8
    $region5: #{tpu_custom_call.1} parent=1 // loop_body
      %s19 = ssub.s32 %s14, 1
      %s20 = ssub.s32 %s14, 2
      %s21 = sadd.s32 %s14, 1
      %s23 = sadd.s32 %s22, 1
      %p26 = scmp.eq.s32.totalorder %s14, 1
      %p27 = scmp.ne.s32.totalorder %s22, %s24
      %p28 = scmp.eq.s32.totalorder %s14, 0
      %p29 = por %p27, %p28
      %p30 = scmp.ne.s32.totalorder %s22, %s24
      %p31 = scmp.eq.s32.totalorder %s19, 1
      %p32 = por %p30, %p31
      %p33 = scmp.ne.s32.totalorder %s24, %s25
      %p34 = scmp.eq.s32.totalorder %s19, 0
      %p35 = por %p33, %p34
      %p36 = scmp.ne.s32.totalorder %s24, %s25
      %p37 = scmp.eq.s32.totalorder %s20, 1
      %p38 = por %p36, %p37
      %p40 = scmp.ne.s32.totalorder %s25, %s39
      %p41 = scmp.eq.s32.totalorder %s20, 0
      %p42 = por %p40, %p41
      %s44 = sadd.s32 %s43, 1
      %p47 = scmp.eq.s32.totalorder %s14, 1
      %p48 = scmp.ne.s32.totalorder %s43, %s45
      %p49 = scmp.eq.s32.totalorder %s14, 0
      %p50 = por %p48, %p49
      %p51 = scmp.ne.s32.totalorder %s43, %s45
      %p52 = scmp.eq.s32.totalorder %s19, 1
      %p53 = por %p51, %p52
      %p54 = scmp.ne.s32.totalorder %s45, %s46
      %p55 = scmp.eq.s32.totalorder %s19, 0
      %p56 = por %p54, %p55
      %p57 = scmp.ne.s32.totalorder %s45, %s46
      %p58 = scmp.eq.s32.totalorder %s20, 1
      %p59 = por %p57, %p58
      %p61 = scmp.ne.s32.totalorder %s46, %s60
      %p62 = scmp.eq.s32.totalorder %s20, 0
      %p63 = por %p61, %p62
      %s64 = ssub.s32 %s14, %s21
      %p65 = scmp.eq.s32.totalorder %s64, 0
      %s67 = sadd.s32 %s66, 1
      %s68 = scalar_select %p65, %s66, %s67
      %p71 = pneg %p65
      %p72 = scmp.eq.s32.totalorder %s14, 1
      %p73 = por %p71, %p72
      %p74 = scmp.ne.s32.totalorder %s66, %s69
      %p75 = scmp.eq.s32.totalorder %s14, 0
      %p76 = por %p74, %p75
      %p77 = scmp.ne.s32.totalorder %s66, %s69
      %p78 = scmp.eq.s32.totalorder %s19, 1
      %p79 = por %p77, %p78
      %p80 = scmp.ne.s32.totalorder %s69, %s70
      %p81 = scmp.eq.s32.totalorder %s19, 0
      %p82 = por %p80, %p81
      %p83 = scmp.ne.s32.totalorder %s69, %s70
      %p84 = scmp.eq.s32.totalorder %s20, 1
      %p85 = por %p83, %p84
      %p87 = scmp.ne.s32.totalorder %s70, %s86
      %p88 = scmp.eq.s32.totalorder %s20, 0
      %p89 = por %p87, %p88
      %s90 = ssub.s32 %s14, %s21
      %p91 = scmp.eq.s32.totalorder %s90, 0
      %s93 = sadd.s32 %s92, 1
      %s94 = scalar_select %p91, %s92, %s93
      %p97 = pneg %p91
      %p98 = scmp.eq.s32.totalorder %s14, 1
      %p99 = por %p97, %p98
      %p100 = scmp.ne.s32.totalorder %s92, %s95
      %p101 = scmp.eq.s32.totalorder %s14, 0
      %p102 = por %p100, %p101
      %p103 = scmp.ne.s32.totalorder %s92, %s95
      %p104 = scmp.eq.s32.totalorder %s19, 1
      %p105 = por %p103, %p104
      %p106 = scmp.ne.s32.totalorder %s95, %s96
      %p107 = scmp.eq.s32.totalorder %s19, 0
      %p108 = por %p106, %p107
      %p109 = scmp.ne.s32.totalorder %s95, %s96
      %p110 = scmp.eq.s32.totalorder %s20, 1
      %p111 = por %p109, %p110
      %p113 = scmp.ne.s32.totalorder %s96, %s112
      %p114 = scmp.eq.s32.totalorder %s20, 0
      %p115 = por %p113, %p114
      %s116 = ssub.s32 %s14, %s21
      %p117 = scmp.eq.s32.totalorder %s116, 0
      %s119 = sadd.s32 %s118, 1
      %s120 = scalar_select %p117, %s118, %s119
      %p123 = pneg %p117
      %p124 = scmp.eq.s32.totalorder %s14, 1
      %p125 = por %p123, %p124
      %p126 = scmp.ne.s32.totalorder %s118, %s121
      %p127 = scmp.eq.s32.totalorder %s14, 0
      %p128 = por %p126, %p127
      %p129 = scmp.ne.s32.totalorder %s118, %s121
      %p130 = scmp.eq.s32.totalorder %s19, 1
      %p131 = por %p129, %p130
      %p132 = scmp.ne.s32.totalorder %s121, %s122
      %p133 = scmp.eq.s32.totalorder %s19, 0
      %p134 = por %p132, %p133
      %p135 = scmp.ne.s32.totalorder %s121, %s122
      %p136 = scmp.eq.s32.totalorder %s20, 1
      %p137 = por %p135, %p136
      %p139 = scmp.ne.s32.totalorder %s122, %s138
      %p140 = scmp.eq.s32.totalorder %s20, 0
      %p141 = por %p139, %p140
      %s142 = ssub.s32 %s14, %s21
      %p143 = scmp.eq.s32.totalorder %s142, 0
      %s145 = sadd.s32 %s144, 1
      %s146 = scalar_select %p143, %s144, %s145
      %p149 = pneg %p143
      %p150 = scmp.eq.s32.totalorder %s14, 1
      %p151 = por %p149, %p150
      %p152 = scmp.ne.s32.totalorder %s144, %s147
      %p153 = scmp.eq.s32.totalorder %s14, 0
      %p154 = por %p152, %p153
      %p155 = scmp.ne.s32.totalorder %s144, %s147
      %p156 = scmp.eq.s32.totalorder %s19, 1
      %p157 = por %p155, %p156
      %p158 = scmp.ne.s32.totalorder %s147, %s148
      %p159 = scmp.eq.s32.totalorder %s19, 0
      %p160 = por %p158, %p159
      %p161 = scmp.ne.s32.totalorder %s147, %s148
      %p162 = scmp.eq.s32.totalorder %s20, 1
      %p163 = por %p161, %p162
      %p165 = scmp.ne.s32.totalorder %s148, %s164
      %p166 = scmp.eq.s32.totalorder %s20, 0
      %p167 = por %p165, %p166
      %p168 = scmp.le.s32.totalorder 1, %s14
      %p169 = scmp.lt.s32.totalorder %s14, 3
      %p170 = pnand %p168, %p169
      %p171 = pneg %p170
      // Predicated region
      $region9: #{tpu_custom_call.1} parent=5 // pred_check
        _
      $region10: #{tpu_custom_call.1} parent=5 // pred_check_branch
        %173 = sbr.rel (%p170) target = $region12
      $region11: #{tpu_custom_call.1} parent=5 // pred_region
        %s174 = ssub.s32 %s14, 1
        // Predicated region
        $region13: #{tpu_custom_call.1} parent=11 // pred_check
          %p175 = pneg %p35
        $region14: #{tpu_custom_call.1} parent=11 // pred_check_branch
          %177 = sbr.rel (%p175) target = $region16
        $region15: #{tpu_custom_call.1} parent=11 // pred_region
          _
        $region16: #{tpu_custom_call.1} parent=11 // pred_fallthru
          _
        // Predicated region
        $region17: #{tpu_custom_call.1} parent=11 // pred_check
          %p178 = pneg %p56
        $region18: #{tpu_custom_call.1} parent=11 // pred_check_branch
          %180 = sbr.rel (%p178) target = $region20
        $region19: #{tpu_custom_call.1} parent=11 // pred_region
          _
        $region20: #{tpu_custom_call.1} parent=11 // pred_fallthru
          _
      $region12: #{tpu_custom_call.1} parent=5 // pred_fallthru
        _
      %p181 = scmp.lt.s32.totalorder %s14, 2
      // Predicated region
      $region21: #{tpu_custom_call.1} parent=5 // pred_check
        %p182 = pneg %p181
      $region22: #{tpu_custom_call.1} parent=5 // pred_check_branch
        %184 = sbr.rel (%p182) target = $region24
      $region23: #{tpu_custom_call.1} parent=5 // pred_region
        // Predicated region
        $region25: #{tpu_custom_call.1} parent=23 // pred_check
          %p185 = pneg %p76
        $region26: #{tpu_custom_call.1} parent=23 // pred_check_branch
          %187 = sbr.rel (%p185) target = $region28
        $region27: #{tpu_custom_call.1} parent=23 // pred_region
          %s188 = smul.u32 16, %s14
          %s189 = ssub.s32 25, %s188
          %p190 = scmp.lt.s32.totalorder %s189, 16
          %s191 = scalar_select %p190, %s189, 16
          %s192 = smul.u32 128, %s191
          %p193 = scmp.lt.s32.totalorder %s188, 24
          %s194 = scalar_select %p193, %s188, 24
          %s195 = smul.addr %s194, 8
          %s196 = scalar_lea.vmem %s2, %s195
          %s197 = smul.u32 16, %s14
          %s198 = ssub.s32 25, %s197
          %p199 = scmp.lt.s32.totalorder %s198, 16
          %s200 = scalar_select %p199, %s198, 16
          %s201 = smul.u32 128, %s200
        $region28: #{tpu_custom_call.1} parent=23 // pred_fallthru
          _
        // Predicated region
        $region29: #{tpu_custom_call.1} parent=23 // pred_check
          %p202 = pneg %p102
        $region30: #{tpu_custom_call.1} parent=23 // pred_check_branch
          %204 = sbr.rel (%p202) target = $region32
        $region31: #{tpu_custom_call.1} parent=23 // pred_region
          %p205 = scmp.lt.s32.totalorder %s14, 1
          %s206 = scalar_select %p205, %s14, 1
          %s207 = scalar_lea.vmem %s3, %s206
        $region32: #{tpu_custom_call.1} parent=23 // pred_fallthru
          _
        // Predicated region
        $region33: #{tpu_custom_call.1} parent=23 // pred_check
          %p208 = pneg %p128
        $region34: #{tpu_custom_call.1} parent=23 // pred_check_branch
          %210 = sbr.rel (%p208) target = $region36
        $region35: #{tpu_custom_call.1} parent=23 // pred_region
          %p211 = scmp.lt.s32.totalorder %s14, 1
          %s212 = scalar_select %p211, %s14, 1
          %s213 = scalar_lea.vmem %s4, %s212
        $region36: #{tpu_custom_call.1} parent=23 // pred_fallthru
          _
      $region24: #{tpu_custom_call.1} parent=5 // pred_fallthru
        _
      %p214 = scmp.le.s32.totalorder 1, %s14
      %p215 = scmp.lt.s32.totalorder %s14, 3
      %p216 = pnand %p214, %p215
      %p217 = pneg %p216
      // Predicated region
      $region37: #{tpu_custom_call.1} parent=5 // pred_check
        _
      $region38: #{tpu_custom_call.1} parent=5 // pred_check_branch
        %219 = sbr.rel (%p216) target = $region40
      $region39: #{tpu_custom_call.1} parent=5 // pred_region
        %s220 = ssub.s32 %s14, 1
        %p221 = pneg %p35
        %p222 = pneg %p32
        %p223 = pneg %p56
        %p224 = pneg %p53
        %s225 = smul.u32 16, %s19
        %s226 = ssub.s32 25, %s225
        %p227 = scmp.lt.s32.totalorder %s226, 16
        %s228 = scalar_select %p227, %s226, 16
        %s229 = smul.u32 128, %s228
        %p230 = scmp.lt.s32.totalorder %s225, 24
        %s231 = scalar_select %p230, %s225, 24
        %s232 = smul.addr %s231, 8
        %s233 = scalar_lea.vmem %s2, %s232
        %p234 = pneg %p82
        %p235 = pneg %p79
        %p236 = scmp.lt.s32.totalorder %s19, 1
        %s237 = scalar_select %p236, %s19, 1
        %s238 = scalar_lea.vmem %s3, %s237
        %p239 = pneg %p108
        %p240 = pneg %p105
        %p241 = scmp.lt.s32.totalorder %s19, 1
        %s242 = scalar_select %p241, %s19, 1
        %s243 = scalar_lea.vmem %s4, %s242
        %p244 = pneg %p134
        %p245 = pneg %p131
        %p246 = pneg %p160
        %p247 = pneg %p157
        %s248 = sand.u32 %s147, 1
        %s249 = scalar_lea.sflag [#allocation3], %s248
        %s250 = sand.u32 %s147, 1
        %s251 = scalar_lea.vmem [#allocation2], %s250
        %s252 = smul.u32 16, %s19
        %s253 = ssub.s32 25, %s252
        %p254 = scmp.lt.s32.totalorder %s253, 16
        %s255 = scalar_select %p254, %s253, 16
        %s256 = smul.u32 128, %s255
        %p257 = scmp.lt.s32.totalorder %s252, 24
        %s258 = scalar_select %p257, %s252, 24
        %s259 = smul.addr %s258, 8
        %s260 = scalar_lea.vmem %s2, %s259
        %s261 = smul.u32 16, %s19
        %s262 = ssub.s32 25, %s261
        %p263 = scmp.lt.s32.totalorder %s262, 16
        %s264 = scalar_select %p263, %s262, 16
        %s265 = smul.u32 128, %s264
        %p266 = scmp.lt.s32.totalorder %s19, 1
        %s267 = scalar_select %p266, %s19, 1
        %s268 = scalar_lea.vmem %s3, %s267
        %p269 = scmp.lt.s32.totalorder %s19, 1
        %s270 = scalar_select %p269, %s19, 1
        %s271 = scalar_lea.vmem %s4, %s270
        %v272 = vlaneseq
        %v273 = vand.u32 %v272, 127
        %s274 = smul.u32 %s19, 128
        %v275 = vstv %s274
        %v276 = vadd.s32 %v275, %v273
        %vm277 = vcmp.lt.s32.totalorder %v276, 200
        %v278 = vld [vmem:[%s268] sm:$0x1]
        %v279 = vsel %vm277, %v278, 0.5
        %v280 = vld [vmem:[%s271] sm:$0x1]
        %v281 = vsel %vm277, %v280, 0.0
        %v282 = vlog2.pop %v279
        %v283 = vmul.f32 %v282, 0.6931472
        %v284 = vmax.f32 %v283, -100.0
        %v285 = vsub.f32 1.0, %v279
        %v286 = vlog2.pop %v285
        %v287 = vmul.f32 %v286, 0.6931472
        %v288 = vmax.f32 %v287, -100.0
        %v289 = vmul.f32 %v281, %v284
        %v290 = vsub.f32 1.0, %v281
        %v291 = vmul.f32 %v290, %v288
        %v292 = vadd.f32 %v289, %v291
        %v293 = vsub.f32 0.0, %v292
        %v294 = vsel %vm277, %v293, 0.0
        %vm295 = vcmask 1040384
        %v296 = vsel %vm295, %v294, 0.0
        %297 = vadd.xlane.f32.xlu0 %v296
        %v298 = vpop.xlane.xlu0 %297
        %v299 = vrot.slane %v298, 4
        %v300 = vadd.f32 %v298, %v299
        %v301 = vrot.slane %v300, 2
        %v302 = vadd.f32 %v300, %v301
        %v303 = vrot.slane %v302, 1
        %v304 = vadd.f32 %v302, %v303
        %s305 = vtos %v304
        %v306 = vld [vmem:[%s0] sm:$0x3f]
        %v307 = vld [vmem:[%s260] sm:$0xff]
        %v308 = vld [vmem:[%s260 + $0x8] sm:$0xff]
        %v309 = vld [vmem:[%s260 + $0x10] sm:$0xff]
        %v310 = vld [vmem:[%s260 + $0x18] sm:$0xff]
        %v311 = vld [vmem:[%s260 + $0x20] sm:$0xff]
        %v312 = vld [vmem:[%s260 + $0x28] sm:$0xff]
        %v313 = vld [vmem:[%s260 + $0x30] sm:$0xff]
        %v314 = vld [vmem:[%s260 + $0x38] sm:$0xff]
        %v315 = vld [vmem:[%s260 + $0x40] sm:$0xff]
        %v316 = vld [vmem:[%s260 + $0x48] sm:$0xff]
        %v317 = vld [vmem:[%s260 + $0x50] sm:$0xff]
        %v318 = vld [vmem:[%s260 + $0x58] sm:$0xff]
        %v319 = vld [vmem:[%s260 + $0x60] sm:$0xff]
        %v320 = vld [vmem:[%s260 + $0x68] sm:$0xff]
        %v321 = vld [vmem:[%s260 + $0x70] sm:$0xff]
        %v322 = vld [vmem:[%s260 + $0x78] sm:$0xff]
        %v323 = vld [vmem:[%s1] sm:$0x3f]
        %325 = vset.pattern.permute.xlu0 0
        %326 = vperm.xlu0 %325, %v323
        %v327 = vpop.permute.xlu0 %326
        %vm329 = vcmask 523264
        %v331 = vsel %vm329, %v306, 0
        %v334 = vsel %vm329, %v307, 0
        %v337 = vsel %vm329, %v308, 0
        %v340 = vsel %vm329, %v309, 0
        %v343 = vsel %vm329, %v310, 0
        %v346 = vsel %vm329, %v311, 0
        %v349 = vsel %vm329, %v312, 0
        %v352 = vsel %vm329, %v313, 0
        %v355 = vsel %vm329, %v314, 0
        %v358 = vsel %vm329, %v315, 0
        %v361 = vsel %vm329, %v316, 0
        %v364 = vsel %vm329, %v317, 0
        %v367 = vsel %vm329, %v318, 0
        %v370 = vsel %vm329, %v319, 0
        %v373 = vsel %vm329, %v320, 0
        %v376 = vsel %vm329, %v321, 0
        %v379 = vsel %vm329, %v322, 0
        %381 = vmatprep.subr.mxu0 0.0
        %382 = vmatpush1.xpose.msra.mxu0 %v379
        %383 = vmatprep.subr.mxu0 0.0
        %384 = vmatpush1.xpose.msra.mxu0 %v376
        %385 = vmatprep.subr.mxu0 0.0
        %386 = vmatpush1.xpose.msra.mxu0 %v373
        %387 = vmatprep.subr.mxu0 0.0
        %388 = vmatpush1.xpose.msra.mxu0 %v370
        %389 = vmatprep.subr.mxu0 0.0
        %390 = vmatpush1.xpose.msra.mxu0 %v367
        %391 = vmatprep.subr.mxu0 0.0
        %392 = vmatpush1.xpose.msra.mxu0 %v364
        %393 = vmatprep.subr.mxu0 0.0
        %394 = vmatpush1.xpose.msra.mxu0 %v361
        %395 = vmatprep.subr.mxu0 0.0
        %396 = vmatpush1.xpose.msra.mxu0 %v358
        %397 = vmatprep.subr.mxu0 0.0
        %398 = vmatpush1.xpose.msra.mxu0 %v355
        %399 = vmatprep.subr.mxu0 0.0
        %400 = vmatpush1.xpose.msra.mxu0 %v352
        %401 = vmatprep.subr.mxu0 0.0
        %402 = vmatpush1.xpose.msra.mxu0 %v349
        %403 = vmatprep.subr.mxu0 0.0
        %404 = vmatpush1.xpose.msra.mxu0 %v346
        %405 = vmatprep.subr.mxu0 0.0
        %406 = vmatpush1.xpose.msra.mxu0 %v343
        %407 = vmatprep.subr.mxu0 0.0
        %408 = vmatpush1.xpose.msra.mxu0 %v340
        %409 = vmatprep.subr.mxu0 0.0
        %410 = vmatpush1.xpose.msra.mxu0 %v337
        %411 = vmatprep.subr.mxu0 0.0
        %412 = vmatpush1.xpose.msra.mxu0 %v334
        %413 = vmatprep.subr.mxu0 0.0
        %414 = vmatpush2.xpose.msra.mxu0 0.0
        %415 = vmatprep.subr.mxu0 0.0
        %416 = vmatpush2.xpose.msra.mxu0 0.0
        %417 = vmatprep.subr.mxu0 0.0
        %418 = vmatpush2.xpose.msra.mxu0 0.0
        %419 = vmatprep.subr.mxu0 0.0
        %420 = vmatpush2.xpose.msra.mxu0 0.0
        %421 = vmatprep.subr.mxu0 0.0
        %422 = vmatpush2.xpose.msra.mxu0 0.0
        %423 = vmatprep.subr.mxu0 0.0
        %424 = vmatpush2.xpose.msra.mxu0 0.0
        %425 = vmatprep.subr.mxu0 0.0
        %426 = vmatpush2.xpose.msra.mxu0 0.0
        %427 = vmatprep.subr.mxu0 0.0
        %428 = vmatpush2.xpose.msra.mxu0 0.0
        %429 = vmatprep.subr.mxu0 0.0
        %430 = vmatpush2.xpose.msra.mxu0 0.0
        %431 = vmatprep.subr.mxu0 0.0
        %432 = vmatpush2.xpose.msra.mxu0 0.0
        %433 = vmatprep.subr.mxu0 0.0
        %434 = vmatpush2.xpose.msra.mxu0 0.0
        %435 = vmatprep.subr.mxu0 0.0
        %436 = vmatpush2.xpose.msra.mxu0 0.0
        %437 = vmatprep.subr.mxu0 0.0
        %438 = vmatpush2.xpose.msra.mxu0 0.0
        %439 = vmatprep.subr.mxu0 0.0
        %440 = vmatpush2.xpose.msra.mxu0 0.0
        %441 = vmatprep.subr.mxu0 0.0
        %442 = vmatpush2.xpose.msra.mxu0 0.0
        %443 = vmatprep.subr.mxu0 0.0
        %444 = vmatpush2.xpose.msra.mxu0 0.0
        %445 = vmatprep.mubr.f32.mxu0 0.0
        %446 = vmatmul.mubr.f32.gmra.mxu0 %v331
        %v447 = vpop.f32.mrf.mxu0
        %v448 = vadd.f32 %v327, %v447
        %v449 = vpop.f32.mrf.mxu0
        %450 = vdwg.mxu0
        %vm451 = vcmask 1044480
        %v452 = vsel %vm451, %v448, inf
        %v453 = vrot.slane %v452, 4
        %v454 = vmin.f32 %v452, %v453
        %v455 = vrot.slane %v454, 2
        %v456 = vmin.f32 %v454, %v455
        %v457 = vrot.slane %v456, 1
        %v458 = vmin.f32 %v456, %v457
        %vm459 = vcmp.gt.f32.partialorder %v448, 0.0
        %vm460 = vmand %vm459, %vm277
        %v461 = vxor.u32 %v458, 2147483648
        %v462 = vmul.f32 %v461, 1.442695
        %v463 = vpow.pop %v462
        %v464 = vadd.f32 %v463, 1.0
        %v465 = vrcp.pop %v464
        %v466 = vmul.f32 1.0, %v465
        %v467 = vsub.f32 %v466, 0.5
        %v468 = vmax.f32 %v467, -0.05
        %v469 = vsel %vm460, %v468, 0.0
        %v471 = vrot.slane %v469, 5
        %v473 = vsel %vm295, %v471, 0.0
        %474 = vadd.xlane.f32.xlu0 %v473
        %v475 = vpop.xlane.xlu0 %474
        %v476 = vrot.slane %v475, 4
        %v477 = vadd.f32 %v475, %v476
        %v478 = vrot.slane %v477, 2
        %v479 = vadd.f32 %v477, %v478
        %v480 = vrot.slane %v479, 1
        %v481 = vadd.f32 %v479, %v480
        %s482 = vtos %v481
        %v483 = vsel %vm460, 1.0, 0.0
        %v485 = vrot.slane %v483, 5
        %v487 = vsel %vm295, %v485, 0.0
        %488 = vadd.xlane.f32.xlu0 %v487
        %v489 = vpop.xlane.xlu0 %488
        %v490 = vrot.slane %v489, 4
        %v491 = vadd.f32 %v489, %v490
        %v492 = vrot.slane %v491, 2
        %v493 = vadd.f32 %v491, %v492
        %v494 = vrot.slane %v493, 1
        %v495 = vadd.f32 %v493, %v494
        %s496 = vtos %v495
        %vm497 = vcmp.eq.s32.totalorder %v273, 0
        %v498 = vstv %s305
        %v499 = vsel %vm497, %v498, 0.0
        %vm500 = vcmp.eq.s32.totalorder %v273, 1
        %v501 = vstv %s482
        %v502 = vsel %vm500, %v501, 0.0
        %v503 = vadd.f32 %v499, %v502
        %vm504 = vcmp.eq.s32.totalorder %v273, 2
        %v505 = vstv %s496
        %v506 = vsel %vm504, %v505, 0.0
        %v507 = vadd.f32 %v503, %v506
        %508 = vst [vmem:[%s251] sm:$0x1] %v507
        %s509 = sand.u32 %s147, 1
        %s510 = scalar_lea.sflag [#allocation3], %s509
        %s511 = sand.u32 %s147, 1
        %s512 = scalar_lea.vmem [#allocation2], %s511
        // Predicated region
        $region41: #{tpu_custom_call.1} parent=39 // pred_check
          %p513 = pneg %p157
        $region42: #{tpu_custom_call.1} parent=39 // pred_check_branch
          %515 = sbr.rel (%p513) target = $region44
        $region43: #{tpu_custom_call.1} parent=39 // pred_region
          %s517 = ssub.s32 16, 16
          %518 = vsyncadd %s510, %s517
          %s519 = smul.addr %s19, 16
          %s520 = scalar_lea.hbm %s5, %s519
          %s522 = sshll.u32 %s512, 4
          %s523 = int_to_ptr.vmem [resolvable:$true] %s522
          %525 = dma.vmem_to_hbm [thread:$0]  %s523, 16, %s520, %s510
        $region44: #{tpu_custom_call.1} parent=39 // pred_fallthru
          _
      $region40: #{tpu_custom_call.1} parent=5 // pred_fallthru
        _
      %p526 = scmp.le.s32.totalorder 2, %s14
      // Predicated region
      $region45: #{tpu_custom_call.1} parent=5 // pred_check
        %p527 = pneg %p526
      $region46: #{tpu_custom_call.1} parent=5 // pred_check_branch
        %529 = sbr.rel (%p527) target = $region48
      $region47: #{tpu_custom_call.1} parent=5 // pred_region
        %s530 = ssub.s32 %s14, 2
        // Predicated region
        $region49: #{tpu_custom_call.1} parent=47 // pred_check
          %p531 = pneg %p163
        $region50: #{tpu_custom_call.1} parent=47 // pred_check_branch
          %533 = sbr.rel (%p531) target = $region52
        $region51: #{tpu_custom_call.1} parent=47 // pred_region
          %s534 = sand.u32 %s148, 1
          %s535 = scalar_lea.sflag [#allocation3], %s534
          %s536 = sand.u32 %s148, 1
          %s537 = scalar_lea.vmem [#allocation2], %s536
          %538 = dma.done %s535, 16
        $region52: #{tpu_custom_call.1} parent=47 // pred_fallthru
          _
      $region48: #{tpu_custom_call.1} parent=5 // pred_fallthru
        _
    $region6: #{tpu_custom_call.1} parent=1 // loop_footer
      %s18 = sadd.s32 1, %s14
    $region7: #{tpu_custom_call.1} parent=1 // loop_footer_branch
      %13 = sbr.rel target = $region3
    $region8: #{tpu_custom_call.1} parent=1 // loop_exit
      _
    %539 = vsyncpa [#allocation3], 1
    %s540 = scalar_lea.sflag [#allocation3], 1
    %541 = vsyncpa %s540, 1

</llo_original>
